<compile_context>
chip_gen: v7x
topology: tpu7x:2x2x1
jax: 0.10.0
libtpu: 0.0.40
codegen_flags: <defaults>
</compile_context>

<pallas_src>
import jax
import jax.numpy as jnp
from jax.experimental import pallas as pl
from jax.experimental.pallas import tpu as pltpu


def _ceil_to(x, m):
    return ((x + m - 1) // m) * m


def gmf_kernel(uid_ref, gid_ref, ut_ref, gt_ref, b_ref, o_ref):
    """One batch tile.

    uid_ref, gid_ref : (1, TB)        int32  ids for this tile (VMEM, streamed)
    ut_ref           : (3, D, Vu_p)   bf16   user table, transposed, 3-term split
    gt_ref           : (3, D, Vg_p)   bf16   (genre table * w), transposed, split
    b_ref            : (1,)           f32    linear bias (SMEM scalar)
    o_ref            : (1, TB)        f32    sigmoid(logits), lane-dense
    """
    vu = ut_ref.shape[2]
    vg = gt_ref.shape[2]
    tb = uid_ref.shape[1]

    uids = uid_ref[...]                                     # (1, TB) int32
    gids = gid_ref[...]                                     # (1, TB) int32

    # One-hot selection matrices (VPU iota + compare + select), exact in bf16.
    u_iota = jax.lax.broadcasted_iota(jnp.int32, (vu, tb), 0)
    g_iota = jax.lax.broadcasted_iota(jnp.int32, (vg, tb), 0)
    u_oh = jnp.where(u_iota == uids, 1.0, 0.0).astype(jnp.bfloat16)   # (Vu_p, TB)
    g_oh = jnp.where(g_iota == gids, 1.0, 0.0).astype(jnp.bfloat16)   # (Vg_p, TB)

    def gather(tab_ref, onehot):
        # Sum of 3 single-pass bf16 MXU gathers reconstructs the f32 rows
        # (one-hot side is exact in bf16; table side is an exact 3-term split).
        acc = jnp.dot(tab_ref[0], onehot, preferred_element_type=jnp.float32)
        for s in range(1, tab_ref.shape[0]):
            acc = acc + jnp.dot(tab_ref[s], onehot,
                                preferred_element_type=jnp.float32)
        return acc                                          # (D, TB) f32

    u_emb_t = gather(ut_ref, u_oh)                          # (D, TB)
    gw_emb_t = gather(gt_ref, g_oh)                          # (D, TB)  (w folded in)

    # GMF interaction + folded linear: VPU product, sublane (XLU) reduction.
    prod = u_emb_t * gw_emb_t                                # (D, TB)
    logits = jnp.sum(prod, axis=0, keepdims=True)            # (1, TB)
    logits = logits + b_ref[0]                               # SMEM scalar

    o_ref[...] = jax.nn.sigmoid(logits).astype(o_ref.dtype)  # lane-dense store


def _split_bf16_terms(x_f32, n_terms=3):
    """Exact-ish decomposition of f32 into a stack of bf16 terms (hi/mid/lo)."""
    terms = []
    r = x_f32
    for _ in range(n_terms):
        t = r.astype(jnp.bfloat16)
        terms.append(t)
        r = r - t.astype(jnp.float32)
    return jnp.stack(terms, axis=0)                          # (n_terms, ...) bf16


def prepare_gmf_tables(user_table, genre_table, w):
    """One-time table prep (hoist out of the per-call path when looping).

    Returns (ut3, gt3w):
      ut3  : (3, D, Vu_p) bf16  user table, transposed, bf16 3-term split
      gt3w : (3, D, Vg_p) bf16  (genre table * w), transposed, split
    Vocab dims are zero-padded to multiples of 128.
    """
    f32 = jnp.float32
    D = user_table.shape[1]
    ut = user_table.astype(f32).T                                       # (D, Vu)
    gtw = (genre_table.astype(f32) * w.reshape(1, D).astype(f32)).T     # (D, Vg)

    vu_p = _ceil_to(ut.shape[1], 128)
    vg_p = _ceil_to(gtw.shape[1], 128)
    ut = jnp.pad(ut, ((0, 0), (0, vu_p - ut.shape[1])))
    gtw = jnp.pad(gtw, ((0, 0), (0, vg_p - gtw.shape[1])))

    return _split_bf16_terms(ut), _split_bf16_terms(gtw)


def vanilla_gmf_forward_prepared(user_ids, genre_ids, ut3, gt3w, b, *,
                                 tile_b=4096):
    """Pallas path. user_ids/genre_ids: int (B,). Returns float32 (B, 1)."""
    B = int(user_ids.shape[0])
    f32 = jnp.float32

    # Batch tile sizing: lane-dense (multiple of 128), fat tiles to amortize
    # per-grid-step overhead, but >=2-4 grid points when the batch allows it so
    # the "parallel" axis shards across both v7x TensorCores.
    tb_cap = _ceil_to(min(max(int(tile_b), 128), 8192), 128)
    quarter = _ceil_to(pl.cdiv(B, 4), 128)                   # ~B/4, 128-aligned
    tb = max(512, quarter)                                   # keep tiles fat
    tb = min(tb, tb_cap, _ceil_to(B, 128))                   # never exceed cap/batch
    tb = max(tb, 128)
    n_tiles = pl.cdiv(B, tb)
    b_pad = n_tiles * tb

    uid = jnp.pad(user_ids.astype(jnp.int32), (0, b_pad - B)).reshape(1, b_pad)
    gid = jnp.pad(genre_ids.astype(jnp.int32), (0, b_pad - B)).reshape(1, b_pad)
    b1 = b.reshape(1).astype(f32)                            # (1,) -> SMEM

    out = pl.pallas_call(
        gmf_kernel,
        out_shape=jax.ShapeDtypeStruct((1, b_pad), f32),
        grid=(n_tiles,),
        in_specs=[
            pl.BlockSpec((1, tb), lambda i: (0, i)),         # user ids (streamed)
            pl.BlockSpec((1, tb), lambda i: (0, i)),         # genre ids (streamed)
            pl.BlockSpec(ut3.shape, lambda i: (0, 0, 0)),    # user table (resident)
            pl.BlockSpec(gt3w.shape, lambda i: (0, 0, 0)),   # genre*w table (resident)
            pl.BlockSpec(memory_space=pltpu.MemorySpace.SMEM),   # bias scalar
        ],
        out_specs=pl.BlockSpec((1, tb), lambda i: (0, i)),   # lane-dense output
        compiler_params=pltpu.CompilerParams(
            dimension_semantics=("parallel",),               # megacore on v7x
            vmem_limit_bytes=32 * 1024 * 1024),
    )(uid, gid, ut3, gt3w, b1)

    return out[0, :B].reshape(B, 1)


def vanilla_gmf_forward(user_ids, genre_ids, user_table, genre_table, w, b, *,
                        tile_b=4096, use_pallas=None):
    """Convenience wrapper (re-preps tables every call; hoist for hot loops)."""
    B = int(user_ids.shape[0])
    D = int(user_table.shape[1])
    f32 = jnp.float32

    # At tiny batches the pallas_call launch overhead dwarfs the work; dispatch
    # to fused XLA below a threshold unless explicitly forced.
    if use_pallas is None:
        use_pallas = B >= 1024
    if not use_pallas:
        ue = jnp.take(user_table, user_ids, axis=0).astype(f32)
        ge = jnp.take(genre_table, genre_ids, axis=0).astype(f32)
        logits = jnp.sum(ue * ge * w.reshape(1, D).astype(f32),
                         axis=-1, keepdims=True) + b.reshape(1, 1).astype(f32)
        return jax.nn.sigmoid(logits)

    ut3, gt3w = prepare_gmf_tables(user_table, genre_table, w)
    return vanilla_gmf_forward_prepared(user_ids, genre_ids, ut3, gt3w, b,
                                        tile_b=tile_b)


def init_params(key, user_dict_size, genre_dict_size, emb_dim):
    """Deterministic synthetic parameters matching VanillaGMF.__init__ shapes."""
    k_u, k_g, k_w, k_b = jax.random.split(key, 4)
    # nn.Embedding default init ~ N(0, 1)
    user_table = jax.random.normal(k_u, (user_dict_size, emb_dim), jnp.float32)
    genre_table = jax.random.normal(k_g, (genre_dict_size, emb_dim), jnp.float32)
    # nn.Linear(emb_dim, 1) default init ~ U(-1/sqrt(D), 1/sqrt(D))
    bound = 1.0 / (emb_dim ** 0.5)
    w = jax.random.uniform(k_w, (emb_dim, 1), jnp.float32, -bound, bound)
    b = jax.random.uniform(k_b, (1,), jnp.float32, -bound, bound)
    return user_table, genre_table, w, b


if __name__ == "__main__":
    user_dict_size = 64
    genre_dict_size = 16
    emb_dim = 32
    batch = 8

    key = jax.random.PRNGKey(0)
    k_param, k_uid, k_gid = jax.random.split(key, 3)
    user_table, genre_table, w, b = init_params(
        k_param, user_dict_size, genre_dict_size, emb_dim)

    # x mirrors the PyTorch input convention: x[0]=user ids, x[1]=genre ids.
    user_ids = jax.random.randint(k_uid, (batch,), 0, user_dict_size, jnp.int32)
    genre_ids = jax.random.randint(k_gid, (batch,), 0, genre_dict_size, jnp.int32)
    x = jnp.stack([user_ids, genre_ids], axis=0)             # (2, B) int32

    # Hoisted table prep (done once), then the Pallas forward.
    ut3, gt3w = prepare_gmf_tables(user_table, genre_table, w)
    out = vanilla_gmf_forward_prepared(x[0], x[1], ut3, gt3w, b)
    out = jax.block_until_ready(out)

    # Pure-JAX reference (elementwise + reduce in f32).
    ue = jnp.take(user_table, x[0], axis=0)
    ge = jnp.take(genre_table, x[1], axis=0)
    ref = jax.nn.sigmoid(
        jnp.sum(ue * ge * w.reshape(1, emb_dim), axis=-1, keepdims=True)
        + b.reshape(1, 1))

    assert out.shape == (batch, 1)
    assert jnp.allclose(out, ref, atol=1e-5, rtol=1e-5), \
        float(jnp.max(jnp.abs(out - ref)))
    print("KERNEL_OK")
</pallas_src>

<mosaic_0001>
module attributes {stable_mosaic.version = 11 : i64} {
  func.func @gmf_kernel(%arg0: i32, %arg1: memref<1x128xi32, #tpu.memory_space<vmem>>, %arg2: memref<1x128xi32, #tpu.memory_space<vmem>>, %arg3: memref<3x32x128xbf16, #tpu.memory_space<vmem>>, %arg4: memref<3x32x128xbf16, #tpu.memory_space<vmem>>, %arg5: memref<1xf32, #tpu.memory_space<smem>>, %arg6: memref<1x128xf32, #tpu.memory_space<vmem>>) attributes {dimension_semantics = [#tpu.dimension_semantics<parallel>], iteration_bounds = array<i64: 1>, scalar_prefetch = 0 : i64, scratch_operands = 0 : i64, tpu.core_type = #tpu.core_type<tc>, window_params = [{transform_indices = @transform_0, window_bounds = array<i64: 1, 128>}, {transform_indices = @transform_1, window_bounds = array<i64: 1, 128>}, {pipeline_mode = #tpu.pipeline_mode<synchronous>, transform_indices = @transform_2, window_bounds = array<i64: 3, 32, 128>}, {pipeline_mode = #tpu.pipeline_mode<synchronous>, transform_indices = @transform_3, window_bounds = array<i64: 3, 32, 128>}, {transform_indices = @transform_4, window_bounds = array<i64: 1>}, {transform_indices = @transform_5, window_bounds = array<i64: 1, 128>}]} {
    %c0 = arith.constant 0 : index
    %c0_0 = arith.constant 0 : index
    %0 = vector.load %arg1[%c0, %c0_0] : memref<1x128xi32, #tpu.memory_space<vmem>>, vector<1x128xi32>
    %c0_1 = arith.constant 0 : index
    %c0_2 = arith.constant 0 : index
    %1 = vector.load %arg2[%c0_1, %c0_2] : memref<1x128xi32, #tpu.memory_space<vmem>>, vector<1x128xi32>
    %2 = tpu.iota {dimensions = array<i32: 0>} : vector<128x128xi32>
    %3 = tpu.iota {dimensions = array<i32: 0>} : vector<128x128xi32>
    %4 = vector.broadcast %0 : vector<1x128xi32> to vector<128x128xi32>
    %5 = arith.cmpi eq, %2, %4 : vector<128x128xi32>
    %cst = arith.constant 1.000000e+00 : f32
    %cst_3 = arith.constant 0.000000e+00 : f32
    %6 = vector.broadcast %cst : f32 to vector<128x128xf32>
    %7 = vector.broadcast %cst_3 : f32 to vector<128x128xf32>
    %8 = arith.select %5, %6, %7 : vector<128x128xi1>, vector<128x128xf32>
    %9 = arith.truncf %8 : vector<128x128xf32> to vector<128x128xbf16>
    %10 = vector.broadcast %1 : vector<1x128xi32> to vector<128x128xi32>
    %11 = arith.cmpi eq, %3, %10 : vector<128x128xi32>
    %cst_4 = arith.constant 1.000000e+00 : f32
    %cst_5 = arith.constant 0.000000e+00 : f32
    %12 = vector.broadcast %cst_4 : f32 to vector<128x128xf32>
    %13 = vector.broadcast %cst_5 : f32 to vector<128x128xf32>
    %14 = arith.select %11, %12, %13 : vector<128x128xi1>, vector<128x128xf32>
    %15 = arith.truncf %14 : vector<128x128xf32> to vector<128x128xbf16>
    %c0_6 = arith.constant 0 : index
    %c0_7 = arith.constant 0 : index
    %c0_8 = arith.constant 0 : index
    %16 = vector.load %arg3[%c0_6, %c0_7, %c0_8] : memref<3x32x128xbf16, #tpu.memory_space<vmem>>, vector<1x32x128xbf16>
    %17 = vector.shape_cast %16 : vector<1x32x128xbf16> to vector<32x128xbf16>
    %cst_9 = arith.constant dense<0.000000e+00> : vector<32x128xf32>
    %18 = tpu.matmul %17, %9, %cst_9 {dimension_numbers = #tpu.dot_dimension_numbers<[1], [0], [0], [1], [0, 0, 1, 1], [], []>} : vector<32x128xbf16>, vector<128x128xbf16>, vector<32x128xf32> -> vector<32x128xf32>
    %c1 = arith.constant 1 : index
    %c0_10 = arith.constant 0 : index
    %c0_11 = arith.constant 0 : index
    %19 = vector.load %arg3[%c1, %c0_10, %c0_11] : memref<3x32x128xbf16, #tpu.memory_space<vmem>>, vector<1x32x128xbf16>
    %20 = vector.shape_cast %19 : vector<1x32x128xbf16> to vector<32x128xbf16>
    %cst_12 = arith.constant dense<0.000000e+00> : vector<32x128xf32>
    %21 = tpu.matmul %20, %9, %cst_12 {dimension_numbers = #tpu.dot_dimension_numbers<[1], [0], [0], [1], [0, 0, 1, 1], [], []>} : vector<32x128xbf16>, vector<128x128xbf16>, vector<32x128xf32> -> vector<32x128xf32>
    %22 = arith.addf %18, %21 : vector<32x128xf32>
    %c2 = arith.constant 2 : index
    %c0_13 = arith.constant 0 : index
    %c0_14 = arith.constant 0 : index
    %23 = vector.load %arg3[%c2, %c0_13, %c0_14] : memref<3x32x128xbf16, #tpu.memory_space<vmem>>, vector<1x32x128xbf16>
    %24 = vector.shape_cast %23 : vector<1x32x128xbf16> to vector<32x128xbf16>
    %cst_15 = arith.constant dense<0.000000e+00> : vector<32x128xf32>
    %25 = tpu.matmul %24, %9, %cst_15 {dimension_numbers = #tpu.dot_dimension_numbers<[1], [0], [0], [1], [0, 0, 1, 1], [], []>} : vector<32x128xbf16>, vector<128x128xbf16>, vector<32x128xf32> -> vector<32x128xf32>
    %26 = arith.addf %22, %25 : vector<32x128xf32>
    %c0_16 = arith.constant 0 : index
    %c0_17 = arith.constant 0 : index
    %c0_18 = arith.constant 0 : index
    %27 = vector.load %arg4[%c0_16, %c0_17, %c0_18] : memref<3x32x128xbf16, #tpu.memory_space<vmem>>, vector<1x32x128xbf16>
    %28 = vector.shape_cast %27 : vector<1x32x128xbf16> to vector<32x128xbf16>
    %cst_19 = arith.constant dense<0.000000e+00> : vector<32x128xf32>
    %29 = tpu.matmul %28, %15, %cst_19 {dimension_numbers = #tpu.dot_dimension_numbers<[1], [0], [0], [1], [0, 0, 1, 1], [], []>} : vector<32x128xbf16>, vector<128x128xbf16>, vector<32x128xf32> -> vector<32x128xf32>
    %c1_20 = arith.constant 1 : index
    %c0_21 = arith.constant 0 : index
    %c0_22 = arith.constant 0 : index
    %30 = vector.load %arg4[%c1_20, %c0_21, %c0_22] : memref<3x32x128xbf16, #tpu.memory_space<vmem>>, vector<1x32x128xbf16>
    %31 = vector.shape_cast %30 : vector<1x32x128xbf16> to vector<32x128xbf16>
    %cst_23 = arith.constant dense<0.000000e+00> : vector<32x128xf32>
    %32 = tpu.matmul %31, %15, %cst_23 {dimension_numbers = #tpu.dot_dimension_numbers<[1], [0], [0], [1], [0, 0, 1, 1], [], []>} : vector<32x128xbf16>, vector<128x128xbf16>, vector<32x128xf32> -> vector<32x128xf32>
    %33 = arith.addf %29, %32 : vector<32x128xf32>
    %c2_24 = arith.constant 2 : index
    %c0_25 = arith.constant 0 : index
    %c0_26 = arith.constant 0 : index
    %34 = vector.load %arg4[%c2_24, %c0_25, %c0_26] : memref<3x32x128xbf16, #tpu.memory_space<vmem>>, vector<1x32x128xbf16>
    %35 = vector.shape_cast %34 : vector<1x32x128xbf16> to vector<32x128xbf16>
    %cst_27 = arith.constant dense<0.000000e+00> : vector<32x128xf32>
    %36 = tpu.matmul %35, %15, %cst_27 {dimension_numbers = #tpu.dot_dimension_numbers<[1], [0], [0], [1], [0, 0, 1, 1], [], []>} : vector<32x128xbf16>, vector<128x128xbf16>, vector<32x128xf32> -> vector<32x128xf32>
    %37 = arith.addf %33, %36 : vector<32x128xf32>
    %38 = arith.mulf %26, %37 : vector<32x128xf32>
    %cst_28 = arith.constant dense<0.000000e+00> : vector<128xf32>
    %39 = vector.multi_reduction <add>, %38, %cst_28 [0] : vector<32x128xf32> to vector<128xf32>
    %40 = vector.shape_cast %39 : vector<128xf32> to vector<1x128xf32>
    %c0_29 = arith.constant 0 : index
    %41 = memref.load %arg5[%c0_29] : memref<1xf32, #tpu.memory_space<smem>>
    %42 = vector.broadcast %41 : f32 to vector<1x128xf32>
    %43 = arith.addf %40, %42 : vector<1x128xf32>
    %44 = arith.negf %43 : vector<1x128xf32>
    %45 = math.exp %44 : vector<1x128xf32>
    %cst_30 = arith.constant 1.000000e+00 : f32
    %46 = vector.broadcast %cst_30 : f32 to vector<1x128xf32>
    %47 = arith.addf %46, %45 : vector<1x128xf32>
    %48 = arith.divf %46, %47 : vector<1x128xf32>
    %c0_31 = arith.constant 0 : index
    %c0_32 = arith.constant 0 : index
    %49 = vector.load %arg6[%c0_31, %c0_32] : memref<1x128xf32, #tpu.memory_space<vmem>>, vector<1x128xf32>
    tpu.vector_store %arg6[%c0_31, %c0_32], %48 {strides = array<i32>} : memref<1x128xf32, #tpu.memory_space<vmem>>, vector<1x128xf32>,
    return
  }
  func.func @transform_0(%arg0: i32) -> (i32, i32) {
    %c0_i32 = arith.constant 0 : i32
    %c0_i32_0 = arith.constant 0 : i32
    return %c0_i32, %arg0 : i32, i32
  }
  func.func @transform_1(%arg0: i32) -> (i32, i32) {
    %c0_i32 = arith.constant 0 : i32
    %c0_i32_0 = arith.constant 0 : i32
    return %c0_i32, %arg0 : i32, i32
  }
  func.func @transform_2(%arg0: i32) -> (i32, i32, i32) {
    %c0_i32 = arith.constant 0 : i32
    %c0_i32_0 = arith.constant 0 : i32
    %c0_i32_1 = arith.constant 0 : i32
    %c0_i32_2 = arith.constant 0 : i32
    return %c0_i32, %c0_i32_0, %c0_i32_1 : i32, i32, i32
  }
  func.func @transform_3(%arg0: i32) -> (i32, i32, i32) {
    %c0_i32 = arith.constant 0 : i32
    %c0_i32_0 = arith.constant 0 : i32
    %c0_i32_1 = arith.constant 0 : i32
    %c0_i32_2 = arith.constant 0 : i32
    return %c0_i32, %c0_i32_0, %c0_i32_1 : i32, i32, i32
  }
  func.func @transform_4(%arg0: i32) -> i32 {
    %c0_i32 = arith.constant 0 : i32
    %c0_i32_0 = arith.constant 0 : i32
    return %c0_i32 : i32
  }
  func.func @transform_5(%arg0: i32) -> (i32, i32) {
    %c0_i32 = arith.constant 0 : i32
    %c0_i32_0 = arith.constant 0 : i32
    return %c0_i32, %arg0 : i32, i32
  }
}

</mosaic_0001>

<llo_original>
// kernel: tpu_custom_call.1
$region0: #{tpu_custom_call.1}
  #allocation0 [shape = 'u32[]', space=smem, size = 0x4, offset = 0x4, fixed_abs, tag = 'smem constant byte address 0x4 - core index']
  #allocation1 [shape = 'u32[144,128]{1,0:T(1,128)}', space=vmem, size = 0x12000, scoped, tag = 'internal scratch']
  #allocation2 [shape = 'f32[1]{0:T(128)S(6)}', space=smem, size = 0x200, scoped, tag = 'scoped memory for tpu_custom_call.1']
  %s0 = inlined_call_operand.vmem [shape: s32[1,128], index: 0, kind: input, shape index: {}]
  %s1 = inlined_call_operand.vmem [shape: s32[1,128], index: 1, kind: input, shape index: {}]
  %s2 = inlined_call_operand.hbm [shape: bf16[3,32,128], index: 2, kind: input, shape index: {}]
  %s3 = inlined_call_operand.hbm [shape: bf16[3,32,128], index: 3, kind: input, shape index: {}]
  %s4 = inlined_call_operand.<no memory space> [shape: f32[1], index: 4, kind: input, shape index: {}]
  %s5 = inlined_call_operand.hbm [shape: f32[1,128], index: 5, kind: output, shape index: {}]
  %s6 = sld [smem:[#allocation0]]
  $region38: #{tpu_custom_call.1} parent=0
    _
  %s8 = ssub.s32 1, %s6
  %s9 = scalar_select 0, %s8, %s6
  %10 = sst [smem:[#allocation2]] %s4
  $region1: #{tpu_custom_call.1} parent=0
    #allocation3 [shape = 'u8[24576]{0}', space=vmem, size = 0x6000, scoped, tag = 'input window, operand 2, single buffered']
    #allocation4 [shape = 's32[1]{0}', space=sflag, size = 0x4, scoped, tag = 'scoped memory for tpu_custom_call.1']
    #allocation5 [shape = 's32[1]{0}', space=sflag, size = 0x4, scoped, tag = 'scoped memory for tpu_custom_call.1']
    #allocation6 [shape = 'u8[24576]{0}', space=vmem, size = 0x6000, scoped, tag = 'input window, operand 3, single buffered']
    #allocation7 [shape = 's32[1]{0}', space=sflag, size = 0x4, scoped, tag = 'scoped memory for tpu_custom_call.1']
    #allocation8 [shape = 'u8[512]{0}', space=vmem, size = 0x400, scoped, tag = 'output window, operand 0, single buffered']
    %11 = vsyncpa [#allocation4], 0
    %12 = vsyncpa [#allocation7], 0
    %13 = vsyncpa [#allocation5], 0
    // Predicated region
    $region2: #{tpu_custom_call.1} parent=1 // pred_check
      _
    $region3: #{tpu_custom_call.1} parent=1 // pred_check_branch
      %15 = sbr.rel (0) target = $region5
    $region4: #{tpu_custom_call.1} parent=1 // pred_region
      _
    $region5: #{tpu_custom_call.1} parent=1 // pred_fallthru
      _
    // Predicated region
    $region6: #{tpu_custom_call.1} parent=1 // pred_check
      _
    $region7: #{tpu_custom_call.1} parent=1 // pred_check_branch
      %17 = sbr.rel (0) target = $region9
    $region8: #{tpu_custom_call.1} parent=1 // pred_region
      _
    $region9: #{tpu_custom_call.1} parent=1 // pred_fallthru
      _
    // Predicated region
    $region10: #{tpu_custom_call.1} parent=1 // pred_check
      _
    $region11: #{tpu_custom_call.1} parent=1 // pred_check_branch
      %19 = sbr.rel (0) target = $region13
    $region12: #{tpu_custom_call.1} parent=1 // pred_region
      %s21 = ssub.s32 768, 768
      %22 = vsyncadd [#allocation4], %s21
      %s23 = sshll.u32 [#allocation3], 4
      %s24 = int_to_ptr.vmem [resolvable:$true] %s23
      %29 = dma.hbm_to_vmem [thread:$0]  %s2, 768, %s24, [#allocation4], 64, 64, 4
    $region13: #{tpu_custom_call.1} parent=1 // pred_fallthru
      _
    // Predicated region
    $region14: #{tpu_custom_call.1} parent=1 // pred_check
      _
    $region15: #{tpu_custom_call.1} parent=1 // pred_check_branch
      %31 = sbr.rel (0) target = $region17
    $region16: #{tpu_custom_call.1} parent=1 // pred_region
      %s33 = ssub.s32 768, 768
      %34 = vsyncadd [#allocation7], %s33
      %s35 = sshll.u32 [#allocation6], 4
      %s36 = int_to_ptr.vmem [resolvable:$true] %s35
      %41 = dma.hbm_to_vmem [thread:$0]  %s3, 768, %s36, [#allocation7], 64, 64, 4
    $region17: #{tpu_custom_call.1} parent=1 // pred_fallthru
      _
    // Predicated region
    $region18: #{tpu_custom_call.1} parent=1 // pred_check
      _
    $region19: #{tpu_custom_call.1} parent=1 // pred_check_branch
      %43 = sbr.rel (0) target = $region21
    $region20: #{tpu_custom_call.1} parent=1 // pred_region
      _
    $region21: #{tpu_custom_call.1} parent=1 // pred_fallthru
      _
    // Predicated region
    $region22: #{tpu_custom_call.1} parent=1 // pred_check
      _
    $region23: #{tpu_custom_call.1} parent=1 // pred_check_branch
      %45 = sbr.rel (0) target = $region25
    $region24: #{tpu_custom_call.1} parent=1 // pred_region
      %46 = dma.done [#allocation4], 768
    $region25: #{tpu_custom_call.1} parent=1 // pred_fallthru
      _
    // Predicated region
    $region26: #{tpu_custom_call.1} parent=1 // pred_check
      _
    $region27: #{tpu_custom_call.1} parent=1 // pred_check_branch
      %48 = sbr.rel (0) target = $region29
    $region28: #{tpu_custom_call.1} parent=1 // pred_region
      %49 = dma.done [#allocation7], 768
    $region29: #{tpu_custom_call.1} parent=1 // pred_fallthru
      _
    %v51 = vld [vmem:[%s0] sm:$0x1]
    %v52 = vld [vmem:[%s1] sm:$0x1]
    %v53 = vlaneseq
    %v54 = vshrl.u32 %v53, 7
    %v55 = vadd.s32 %v54, 8
    %v56 = vadd.s32 %v54, 16
    %v57 = vadd.s32 %v54, 24
    %v58 = vadd.s32 %v54, 32
    %v59 = vadd.s32 %v54, 40
    %v60 = vadd.s32 %v54, 48
    %v61 = vadd.s32 %v54, 56
    %v62 = vadd.s32 %v54, 64
    %v63 = vadd.s32 %v54, 72
    %v64 = vadd.s32 %v54, 80
    %v65 = vadd.s32 %v54, 88
    %v66 = vadd.s32 %v54, 96
    %v67 = vadd.s32 %v54, 104
    %v68 = vadd.s32 %v54, 112
    %v69 = vadd.s32 %v54, 120
    %v70 = vlaneseq
    %v71 = vshrl.u32 %v70, 7
    %v72 = vsub.s32 0, %v71
    %v73 = vrot.slane %v51, %v72
    %vm74 = vcmp.eq.s32.totalorder %v54, %v73
    %vm75 = vcmp.eq.s32.totalorder %v55, %v73
    %vm76 = vcmp.eq.s32.totalorder %v56, %v73
    %vm77 = vcmp.eq.s32.totalorder %v57, %v73
    %vm78 = vcmp.eq.s32.totalorder %v58, %v73
    %vm79 = vcmp.eq.s32.totalorder %v59, %v73
    %vm80 = vcmp.eq.s32.totalorder %v60, %v73
    %vm81 = vcmp.eq.s32.totalorder %v61, %v73
    %vm82 = vcmp.eq.s32.totalorder %v62, %v73
    %vm83 = vcmp.eq.s32.totalorder %v63, %v73
    %vm84 = vcmp.eq.s32.totalorder %v64, %v73
    %vm85 = vcmp.eq.s32.totalorder %v65, %v73
    %vm86 = vcmp.eq.s32.totalorder %v66, %v73
    %vm87 = vcmp.eq.s32.totalorder %v67, %v73
    %vm88 = vcmp.eq.s32.totalorder %v68, %v73
    %vm89 = vcmp.eq.s32.totalorder %v69, %v73
    %v90 = vsel %vm74, 1.0, 0.0
    %v91 = vsel %vm75, 1.0, 0.0
    %v92 = vsel %vm76, 1.0, 0.0
    %v93 = vsel %vm77, 1.0, 0.0
    %v94 = vsel %vm78, 1.0, 0.0
    %v95 = vsel %vm79, 1.0, 0.0
    %v96 = vsel %vm80, 1.0, 0.0
    %v97 = vsel %vm81, 1.0, 0.0
    %v98 = vsel %vm82, 1.0, 0.0
    %v99 = vsel %vm83, 1.0, 0.0
    %v100 = vsel %vm84, 1.0, 0.0
    %v101 = vsel %vm85, 1.0, 0.0
    %v102 = vsel %vm86, 1.0, 0.0
    %v103 = vsel %vm87, 1.0, 0.0
    %v104 = vsel %vm88, 1.0, 0.0
    %v105 = vsel %vm89, 1.0, 0.0
    %v106 = vpack.c.bf16 %v91, %v90
    %v107 = vpack.c.bf16 %v93, %v92
    %v108 = vpack.c.bf16 %v95, %v94
    %v109 = vpack.c.bf16 %v97, %v96
    %v110 = vpack.c.bf16 %v99, %v98
    %v111 = vpack.c.bf16 %v101, %v100
    %v112 = vpack.c.bf16 %v103, %v102
    %v113 = vpack.c.bf16 %v105, %v104
    %v114 = vlaneseq
    %v115 = vshrl.u32 %v114, 7
    %v116 = vsub.s32 0, %v115
    %v117 = vrot.slane %v52, %v116
    %vm118 = vcmp.eq.s32.totalorder %v54, %v117
    %vm119 = vcmp.eq.s32.totalorder %v55, %v117
    %vm120 = vcmp.eq.s32.totalorder %v56, %v117
    %vm121 = vcmp.eq.s32.totalorder %v57, %v117
    %vm122 = vcmp.eq.s32.totalorder %v58, %v117
    %vm123 = vcmp.eq.s32.totalorder %v59, %v117
    %vm124 = vcmp.eq.s32.totalorder %v60, %v117
    %vm125 = vcmp.eq.s32.totalorder %v61, %v117
    %vm126 = vcmp.eq.s32.totalorder %v62, %v117
    %vm127 = vcmp.eq.s32.totalorder %v63, %v117
    %vm128 = vcmp.eq.s32.totalorder %v64, %v117
    %vm129 = vcmp.eq.s32.totalorder %v65, %v117
    %vm130 = vcmp.eq.s32.totalorder %v66, %v117
    %vm131 = vcmp.eq.s32.totalorder %v67, %v117
    %vm132 = vcmp.eq.s32.totalorder %v68, %v117
    %vm133 = vcmp.eq.s32.totalorder %v69, %v117
    %v134 = vsel %vm118, 1.0, 0.0
    %v135 = vsel %vm119, 1.0, 0.0
    %v136 = vsel %vm120, 1.0, 0.0
    %v137 = vsel %vm121, 1.0, 0.0
    %v138 = vsel %vm122, 1.0, 0.0
    %v139 = vsel %vm123, 1.0, 0.0
    %v140 = vsel %vm124, 1.0, 0.0
    %v141 = vsel %vm125, 1.0, 0.0
    %v142 = vsel %vm126, 1.0, 0.0
    %v143 = vsel %vm127, 1.0, 0.0
    %v144 = vsel %vm128, 1.0, 0.0
    %v145 = vsel %vm129, 1.0, 0.0
    %v146 = vsel %vm130, 1.0, 0.0
    %v147 = vsel %vm131, 1.0, 0.0
    %v148 = vsel %vm132, 1.0, 0.0
    %v149 = vsel %vm133, 1.0, 0.0
    %v150 = vpack.c.bf16 %v135, %v134
    %v151 = vpack.c.bf16 %v137, %v136
    %v152 = vpack.c.bf16 %v139, %v138
    %v153 = vpack.c.bf16 %v141, %v140
    %v154 = vpack.c.bf16 %v143, %v142
    %v155 = vpack.c.bf16 %v145, %v144
    %v156 = vpack.c.bf16 %v147, %v146
    %v157 = vpack.c.bf16 %v149, %v148
    %v158 = vld [vmem:[#allocation3] sm:$0xf]
    %v159 = vld [vmem:[#allocation3 + $0x4] sm:$0xf]
    %v160 = vld [vmem:[#allocation3 + $0x8] sm:$0xf]
    %v161 = vld [vmem:[#allocation3 + $0xc] sm:$0xf]
    %s162 = scalar_lea.vmem [#allocation3], 16
    %v163 = vld [vmem:[%s162] sm:$0xf]
    %v164 = vld [vmem:[%s162 + $0x4] sm:$0xf]
    %v165 = vld [vmem:[%s162 + $0x8] sm:$0xf]
    %v166 = vld [vmem:[%s162 + $0xc] sm:$0xf]
    %v171 = vunpack.c.l.b16 %v163
    %v172 = vunpack.c.l.b16 %v164
    %v173 = vunpack.c.l.b16 %v165
    %v174 = vunpack.c.l.b16 %v166
    %v175 = vpack.c.b16 %v172, %v171
    %v176 = vpack.c.b16 %v174, %v173
    %179 = vmatprep.subr.bf16.mxu0 0
    %180 = vmatpush1.bf16.msra.mxu0 %v106
    %181 = vmatprep.subr.bf16.mxu0 0
    %182 = vmatpush1.bf16.msra.mxu0 %v107
    %183 = vmatprep.subr.bf16.mxu0 0
    %184 = vmatpush1.bf16.msra.mxu0 %v108
    %185 = vmatprep.subr.bf16.mxu0 0
    %186 = vmatpush1.bf16.msra.mxu0 %v109
    %187 = vmatprep.subr.bf16.mxu0 0
    %188 = vmatpush1.bf16.msra.mxu0 %v110
    %189 = vmatprep.subr.bf16.mxu0 0
    %190 = vmatpush1.bf16.msra.mxu0 %v111
    %191 = vmatprep.subr.bf16.mxu0 0
    %192 = vmatpush1.bf16.msra.mxu0 %v112
    %193 = vmatprep.subr.bf16.mxu0 0
    %194 = vmatpush1.bf16.msra.mxu0 %v113
    %195 = vmatprep.subr.bf16.mxu0 0
    %196 = vmatpush1.bf16.msra.mxu0 0
    %197 = vmatprep.subr.bf16.mxu0 0
    %198 = vmatpush1.bf16.msra.mxu0 0
    %199 = vmatprep.subr.bf16.mxu0 0
    %200 = vmatpush1.bf16.msra.mxu0 0
    %201 = vmatprep.subr.bf16.mxu0 0
    %202 = vmatpush1.bf16.msra.mxu0 0
    %203 = vmatprep.subr.bf16.mxu0 0
    %204 = vmatpush1.bf16.msra.mxu0 0
    %205 = vmatprep.subr.bf16.mxu0 0
    %206 = vmatpush1.bf16.msra.mxu0 0
    %207 = vmatprep.subr.bf16.mxu0 0
    %208 = vmatpush1.bf16.msra.mxu0 0
    %209 = vmatprep.subr.bf16.mxu0 0
    %210 = vmatpush1.bf16.msra.mxu0 0
    %211 = vmatprep.mubr.bf16.mxu0 0
    %212 = vmatmul.mubr.bf16.gmra.mrb[0].mxu0 %v175
    %v213 = vpop.f32.mrb[0].mxu0
    %v214 = vadd.f32 0.0, %v213
    %v215 = vpop.f32.mrb[0].mxu0
    %v216 = vpop.f32.mrb[0].mxu0
    %v217 = vadd.f32 0.0, %v216
    %v218 = vpop.f32.mrb[0].mxu0
    %219 = vmatprep.mubr.bf16.mxu0 0
    %220 = vmatmul.mubr.bf16.gmra.mrb[0].mxu0 %v176
    %v221 = vpop.f32.mrb[0].mxu0
    %v222 = vadd.f32 0.0, %v221
    %v223 = vpop.f32.mrb[0].mxu0
    %v224 = vpop.f32.mrb[0].mxu0
    %v225 = vadd.f32 0.0, %v224
    %v226 = vpop.f32.mrb[0].mxu0
    %227 = vdwg.mxu0
    %v232 = vunpack.c.l.b16 %v158
    %v233 = vunpack.c.l.b16 %v159
    %v234 = vunpack.c.l.b16 %v160
    %v235 = vunpack.c.l.b16 %v161
    %v236 = vpack.c.b16 %v233, %v232
    %v237 = vpack.c.b16 %v235, %v234
    %240 = vmatprep.subr.bf16.mxu0 0
    %241 = vmatpush1.bf16.msra.mxu0 %v106
    %242 = vmatprep.subr.bf16.mxu0 0
    %243 = vmatpush1.bf16.msra.mxu0 %v107
    %244 = vmatprep.subr.bf16.mxu0 0
    %245 = vmatpush1.bf16.msra.mxu0 %v108
    %246 = vmatprep.subr.bf16.mxu0 0
    %247 = vmatpush1.bf16.msra.mxu0 %v109
    %248 = vmatprep.subr.bf16.mxu0 0
    %249 = vmatpush1.bf16.msra.mxu0 %v110
    %250 = vmatprep.subr.bf16.mxu0 0
    %251 = vmatpush1.bf16.msra.mxu0 %v111
    %252 = vmatprep.subr.bf16.mxu0 0
    %253 = vmatpush1.bf16.msra.mxu0 %v112
    %254 = vmatprep.subr.bf16.mxu0 0
    %255 = vmatpush1.bf16.msra.mxu0 %v113
    %256 = vmatprep.subr.bf16.mxu0 0
    %257 = vmatpush1.bf16.msra.mxu0 0
    %258 = vmatprep.subr.bf16.mxu0 0
    %259 = vmatpush1.bf16.msra.mxu0 0
    %260 = vmatprep.subr.bf16.mxu0 0
    %261 = vmatpush1.bf16.msra.mxu0 0
    %262 = vmatprep.subr.bf16.mxu0 0
    %263 = vmatpush1.bf16.msra.mxu0 0
    %264 = vmatprep.subr.bf16.mxu0 0
    %265 = vmatpush1.bf16.msra.mxu0 0
    %266 = vmatprep.subr.bf16.mxu0 0
    %267 = vmatpush1.bf16.msra.mxu0 0
    %268 = vmatprep.subr.bf16.mxu0 0
    %269 = vmatpush1.bf16.msra.mxu0 0
    %270 = vmatprep.subr.bf16.mxu0 0
    %271 = vmatpush1.bf16.msra.mxu0 0
    %272 = vmatprep.mubr.bf16.mxu0 0
    %273 = vmatmul.mubr.bf16.gmra.mrb[0].mxu0 %v236
    %v274 = vpop.f32.mrb[0].mxu0
    %v275 = vadd.f32 %v214, %v274
    %v276 = vpop.f32.mrb[0].mxu0
    %v277 = vpop.f32.mrb[0].mxu0
    %v278 = vadd.f32 %v217, %v277
    %v279 = vpop.f32.mrb[0].mxu0
    %280 = vmatprep.mubr.bf16.mxu0 0
    %281 = vmatmul.mubr.bf16.gmra.mrb[0].mxu0 %v237
    %v282 = vpop.f32.mrb[0].mxu0
    %v283 = vadd.f32 %v222, %v282
    %v284 = vpop.f32.mrb[0].mxu0
    %v285 = vpop.f32.mrb[0].mxu0
    %v286 = vadd.f32 %v225, %v285
    %v287 = vpop.f32.mrb[0].mxu0
    %288 = vdwg.mxu0
    %s289 = scalar_lea.vmem [#allocation3], 32
    %v290 = vld [vmem:[%s289] sm:$0xf]
    %v291 = vld [vmem:[%s289 + $0x4] sm:$0xf]
    %v292 = vld [vmem:[%s289 + $0x8] sm:$0xf]
    %v293 = vld [vmem:[%s289 + $0xc] sm:$0xf]
    %v298 = vunpack.c.l.b16 %v290
    %v299 = vunpack.c.l.b16 %v291
    %v300 = vunpack.c.l.b16 %v292
    %v301 = vunpack.c.l.b16 %v293
    %v302 = vpack.c.b16 %v299, %v298
    %v303 = vpack.c.b16 %v301, %v300
    %306 = vmatprep.subr.bf16.mxu0 0
    %307 = vmatpush1.bf16.msra.mxu0 %v106
    %308 = vmatprep.subr.bf16.mxu0 0
    %309 = vmatpush1.bf16.msra.mxu0 %v107
    %310 = vmatprep.subr.bf16.mxu0 0
    %311 = vmatpush1.bf16.msra.mxu0 %v108
    %312 = vmatprep.subr.bf16.mxu0 0
    %313 = vmatpush1.bf16.msra.mxu0 %v109
    %314 = vmatprep.subr.bf16.mxu0 0
    %315 = vmatpush1.bf16.msra.mxu0 %v110
    %316 = vmatprep.subr.bf16.mxu0 0
    %317 = vmatpush1.bf16.msra.mxu0 %v111
    %318 = vmatprep.subr.bf16.mxu0 0
    %319 = vmatpush1.bf16.msra.mxu0 %v112
    %320 = vmatprep.subr.bf16.mxu0 0
    %321 = vmatpush1.bf16.msra.mxu0 %v113
    %322 = vmatprep.subr.bf16.mxu0 0
    %323 = vmatpush1.bf16.msra.mxu0 0
    %324 = vmatprep.subr.bf16.mxu0 0
    %325 = vmatpush1.bf16.msra.mxu0 0
    %326 = vmatprep.subr.bf16.mxu0 0
    %327 = vmatpush1.bf16.msra.mxu0 0
    %328 = vmatprep.subr.bf16.mxu0 0
    %329 = vmatpush1.bf16.msra.mxu0 0
    %330 = vmatprep.subr.bf16.mxu0 0
    %331 = vmatpush1.bf16.msra.mxu0 0
    %332 = vmatprep.subr.bf16.mxu0 0
    %333 = vmatpush1.bf16.msra.mxu0 0
    %334 = vmatprep.subr.bf16.mxu0 0
    %335 = vmatpush1.bf16.msra.mxu0 0
    %336 = vmatprep.subr.bf16.mxu0 0
    %337 = vmatpush1.bf16.msra.mxu0 0
    %338 = vmatprep.mubr.bf16.mxu0 0
    %339 = vmatmul.mubr.bf16.gmra.mrb[0].mxu0 %v302
    %v340 = vpop.f32.mrb[0].mxu0
    %v341 = vadd.f32 0.0, %v340
    %v342 = vpop.f32.mrb[0].mxu0
    %v343 = vpop.f32.mrb[0].mxu0
    %v344 = vadd.f32 0.0, %v343
    %v345 = vpop.f32.mrb[0].mxu0
    %346 = vmatprep.mubr.bf16.mxu0 0
    %347 = vmatmul.mubr.bf16.gmra.mrb[0].mxu0 %v303
    %v348 = vpop.f32.mrb[0].mxu0
    %v349 = vadd.f32 0.0, %v348
    %v350 = vpop.f32.mrb[0].mxu0
    %v351 = vpop.f32.mrb[0].mxu0
    %v352 = vadd.f32 0.0, %v351
    %v353 = vpop.f32.mrb[0].mxu0
    %354 = vdwg.mxu0
    %v355 = vadd.f32 %v275, %v341
    %v356 = vadd.f32 %v278, %v344
    %v357 = vadd.f32 %v283, %v349
    %v358 = vadd.f32 %v286, %v352
    %v359 = vld [vmem:[#allocation6] sm:$0xf]
    %v360 = vld [vmem:[#allocation6 + $0x4] sm:$0xf]
    %v361 = vld [vmem:[#allocation6 + $0x8] sm:$0xf]
    %v362 = vld [vmem:[#allocation6 + $0xc] sm:$0xf]
    %s363 = scalar_lea.vmem [#allocation6], 16
    %v364 = vld [vmem:[%s363] sm:$0xf]
    %v365 = vld [vmem:[%s363 + $0x4] sm:$0xf]
    %v366 = vld [vmem:[%s363 + $0x8] sm:$0xf]
    %v367 = vld [vmem:[%s363 + $0xc] sm:$0xf]
    %v372 = vunpack.c.l.b16 %v364
    %v373 = vunpack.c.l.b16 %v365
    %v374 = vunpack.c.l.b16 %v366
    %v375 = vunpack.c.l.b16 %v367
    %v376 = vpack.c.b16 %v373, %v372
    %v377 = vpack.c.b16 %v375, %v374
    %380 = vmatprep.subr.bf16.mxu0 0
    %381 = vmatpush1.bf16.msra.mxu0 %v150
    %382 = vmatprep.subr.bf16.mxu0 0
    %383 = vmatpush1.bf16.msra.mxu0 %v151
    %384 = vmatprep.subr.bf16.mxu0 0
    %385 = vmatpush1.bf16.msra.mxu0 %v152
    %386 = vmatprep.subr.bf16.mxu0 0
    %387 = vmatpush1.bf16.msra.mxu0 %v153
    %388 = vmatprep.subr.bf16.mxu0 0
    %389 = vmatpush1.bf16.msra.mxu0 %v154
    %390 = vmatprep.subr.bf16.mxu0 0
    %391 = vmatpush1.bf16.msra.mxu0 %v155
    %392 = vmatprep.subr.bf16.mxu0 0
    %393 = vmatpush1.bf16.msra.mxu0 %v156
    %394 = vmatprep.subr.bf16.mxu0 0
    %395 = vmatpush1.bf16.msra.mxu0 %v157
    %396 = vmatprep.subr.bf16.mxu0 0
    %397 = vmatpush1.bf16.msra.mxu0 0
    %398 = vmatprep.subr.bf16.mxu0 0
    %399 = vmatpush1.bf16.msra.mxu0 0
    %400 = vmatprep.subr.bf16.mxu0 0
    %401 = vmatpush1.bf16.msra.mxu0 0
    %402 = vmatprep.subr.bf16.mxu0 0
    %403 = vmatpush1.bf16.msra.mxu0 0
    %404 = vmatprep.subr.bf16.mxu0 0
    %405 = vmatpush1.bf16.msra.mxu0 0
    %406 = vmatprep.subr.bf16.mxu0 0
    %407 = vmatpush1.bf16.msra.mxu0 0
    %408 = vmatprep.subr.bf16.mxu0 0
    %409 = vmatpush1.bf16.msra.mxu0 0
    %410 = vmatprep.subr.bf16.mxu0 0
    %411 = vmatpush1.bf16.msra.mxu0 0
    %412 = vmatprep.mubr.bf16.mxu0 0
    %413 = vmatmul.mubr.bf16.gmra.mrb[0].mxu0 %v376
    %v414 = vpop.f32.mrb[0].mxu0
    %v415 = vadd.f32 0.0, %v414
    %v416 = vpop.f32.mrb[0].mxu0
    %v417 = vpop.f32.mrb[0].mxu0
    %v418 = vadd.f32 0.0, %v417
    %v419 = vpop.f32.mrb[0].mxu0
    %420 = vmatprep.mubr.bf16.mxu0 0
    %421 = vmatmul.mubr.bf16.gmra.mrb[0].mxu0 %v377
    %v422 = vpop.f32.mrb[0].mxu0
    %v423 = vadd.f32 0.0, %v422
    %v424 = vpop.f32.mrb[0].mxu0
    %v425 = vpop.f32.mrb[0].mxu0
    %v426 = vadd.f32 0.0, %v425
    %v427 = vpop.f32.mrb[0].mxu0
    %428 = vdwg.mxu0
    %v433 = vunpack.c.l.b16 %v359
    %v434 = vunpack.c.l.b16 %v360
    %v435 = vunpack.c.l.b16 %v361
    %v436 = vunpack.c.l.b16 %v362
    %v437 = vpack.c.b16 %v434, %v433
    %v438 = vpack.c.b16 %v436, %v435
    %441 = vmatprep.subr.bf16.mxu0 0
    %442 = vmatpush1.bf16.msra.mxu0 %v150
    %443 = vmatprep.subr.bf16.mxu0 0
    %444 = vmatpush1.bf16.msra.mxu0 %v151
    %445 = vmatprep.subr.bf16.mxu0 0
    %446 = vmatpush1.bf16.msra.mxu0 %v152
    %447 = vmatprep.subr.bf16.mxu0 0
    %448 = vmatpush1.bf16.msra.mxu0 %v153
    %449 = vmatprep.subr.bf16.mxu0 0
    %450 = vmatpush1.bf16.msra.mxu0 %v154
    %451 = vmatprep.subr.bf16.mxu0 0
    %452 = vmatpush1.bf16.msra.mxu0 %v155
    %453 = vmatprep.subr.bf16.mxu0 0
    %454 = vmatpush1.bf16.msra.mxu0 %v156
    %455 = vmatprep.subr.bf16.mxu0 0
    %456 = vmatpush1.bf16.msra.mxu0 %v157
    %457 = vmatprep.subr.bf16.mxu0 0
    %458 = vmatpush1.bf16.msra.mxu0 0
    %459 = vmatprep.subr.bf16.mxu0 0
    %460 = vmatpush1.bf16.msra.mxu0 0
    %461 = vmatprep.subr.bf16.mxu0 0
    %462 = vmatpush1.bf16.msra.mxu0 0
    %463 = vmatprep.subr.bf16.mxu0 0
    %464 = vmatpush1.bf16.msra.mxu0 0
    %465 = vmatprep.subr.bf16.mxu0 0
    %466 = vmatpush1.bf16.msra.mxu0 0
    %467 = vmatprep.subr.bf16.mxu0 0
    %468 = vmatpush1.bf16.msra.mxu0 0
    %469 = vmatprep.subr.bf16.mxu0 0
    %470 = vmatpush1.bf16.msra.mxu0 0
    %471 = vmatprep.subr.bf16.mxu0 0
    %472 = vmatpush1.bf16.msra.mxu0 0
    %473 = vmatprep.mubr.bf16.mxu0 0
    %474 = vmatmul.mubr.bf16.gmra.mrb[0].mxu0 %v437
    %v475 = vpop.f32.mrb[0].mxu0
    %v476 = vadd.f32 %v415, %v475
    %v477 = vpop.f32.mrb[0].mxu0
    %v478 = vpop.f32.mrb[0].mxu0
    %v479 = vadd.f32 %v418, %v478
    %v480 = vpop.f32.mrb[0].mxu0
    %481 = vmatprep.mubr.bf16.mxu0 0
    %482 = vmatmul.mubr.bf16.gmra.mrb[0].mxu0 %v438
    %v483 = vpop.f32.mrb[0].mxu0
    %v484 = vadd.f32 %v423, %v483
    %v485 = vpop.f32.mrb[0].mxu0
    %v486 = vpop.f32.mrb[0].mxu0
    %v487 = vadd.f32 %v426, %v486
    %v488 = vpop.f32.mrb[0].mxu0
    %489 = vdwg.mxu0
    %s490 = scalar_lea.vmem [#allocation6], 32
    %v491 = vld [vmem:[%s490] sm:$0xf]
    %v492 = vld [vmem:[%s490 + $0x4] sm:$0xf]
    %v493 = vld [vmem:[%s490 + $0x8] sm:$0xf]
    %v494 = vld [vmem:[%s490 + $0xc] sm:$0xf]
    %v499 = vunpack.c.l.b16 %v491
    %v500 = vunpack.c.l.b16 %v492
    %v501 = vunpack.c.l.b16 %v493
    %v502 = vunpack.c.l.b16 %v494
    %v503 = vpack.c.b16 %v500, %v499
    %v504 = vpack.c.b16 %v502, %v501
    %507 = vmatprep.subr.bf16.mxu0 0
    %508 = vmatpush1.bf16.msra.mxu0 %v150
    %509 = vmatprep.subr.bf16.mxu0 0
    %510 = vmatpush1.bf16.msra.mxu0 %v151
    %511 = vmatprep.subr.bf16.mxu0 0
    %512 = vmatpush1.bf16.msra.mxu0 %v152
    %513 = vmatprep.subr.bf16.mxu0 0
    %514 = vmatpush1.bf16.msra.mxu0 %v153
    %515 = vmatprep.subr.bf16.mxu0 0
    %516 = vmatpush1.bf16.msra.mxu0 %v154
    %517 = vmatprep.subr.bf16.mxu0 0
    %518 = vmatpush1.bf16.msra.mxu0 %v155
    %519 = vmatprep.subr.bf16.mxu0 0
    %520 = vmatpush1.bf16.msra.mxu0 %v156
    %521 = vmatprep.subr.bf16.mxu0 0
    %522 = vmatpush1.bf16.msra.mxu0 %v157
    %523 = vmatprep.subr.bf16.mxu0 0
    %524 = vmatpush1.bf16.msra.mxu0 0
    %525 = vmatprep.subr.bf16.mxu0 0
    %526 = vmatpush1.bf16.msra.mxu0 0
    %527 = vmatprep.subr.bf16.mxu0 0
    %528 = vmatpush1.bf16.msra.mxu0 0
    %529 = vmatprep.subr.bf16.mxu0 0
    %530 = vmatpush1.bf16.msra.mxu0 0
    %531 = vmatprep.subr.bf16.mxu0 0
    %532 = vmatpush1.bf16.msra.mxu0 0
    %533 = vmatprep.subr.bf16.mxu0 0
    %534 = vmatpush1.bf16.msra.mxu0 0
    %535 = vmatprep.subr.bf16.mxu0 0
    %536 = vmatpush1.bf16.msra.mxu0 0
    %537 = vmatprep.subr.bf16.mxu0 0
    %538 = vmatpush1.bf16.msra.mxu0 0
    %539 = vmatprep.mubr.bf16.mxu0 0
    %540 = vmatmul.mubr.bf16.gmra.mrb[0].mxu0 %v503
    %v541 = vpop.f32.mrb[0].mxu0
    %v542 = vadd.f32 0.0, %v541
    %v543 = vpop.f32.mrb[0].mxu0
    %v544 = vpop.f32.mrb[0].mxu0
    %v545 = vadd.f32 0.0, %v544
    %v546 = vpop.f32.mrb[0].mxu0
    %547 = vmatprep.mubr.bf16.mxu0 0
    %548 = vmatmul.mubr.bf16.gmra.mrb[0].mxu0 %v504
    %v549 = vpop.f32.mrb[0].mxu0
    %v550 = vadd.f32 0.0, %v549
    %v551 = vpop.f32.mrb[0].mxu0
    %v552 = vpop.f32.mrb[0].mxu0
    %v553 = vadd.f32 0.0, %v552
    %v554 = vpop.f32.mrb[0].mxu0
    %555 = vdwg.mxu0
    %v556 = vadd.f32 %v476, %v542
    %v557 = vadd.f32 %v479, %v545
    %v558 = vadd.f32 %v484, %v550
    %v559 = vadd.f32 %v487, %v553
    %v560 = vmul.f32 %v355, %v556
    %v561 = vmul.f32 %v356, %v557
    %v562 = vmul.f32 %v357, %v558
    %v563 = vmul.f32 %v358, %v559
    %v564 = vadd.f32 %v560, %v561
    %v565 = vadd.f32 %v564, %v562
    %v566 = vadd.f32 %v565, %v563
    %v567 = vrot.slane %v566, 4
    %v568 = vadd.f32 %v566, %v567
    %v569 = vrot.slane %v568, 2
    %v570 = vadd.f32 %v568, %v569
    %v571 = vrot.slane %v570, 1
    %v572 = vadd.f32 %v570, %v571
    %s573 = sld [smem:[#allocation2]]
    %v574 = vstv %s573
    %v575 = vadd.f32 %v572, %v574
    %v576 = vxor.u32 %v575, 2147483648
    %v577 = vmul.f32 %v576, 1.442695
    %v578 = vpow.pop %v577
    %v579 = vadd.f32 %v578, 1.0
    %v580 = vrcp.pop %v579
    %v581 = vmul.f32 1.0, %v580
    %582 = vst [vmem:[#allocation8] sm:$0x1] %v581
    // Predicated region
    $region30: #{tpu_custom_call.1} parent=1 // pred_check
      _
    $region31: #{tpu_custom_call.1} parent=1 // pred_check_branch
      %584 = sbr.rel (0) target = $region33
    $region32: #{tpu_custom_call.1} parent=1 // pred_region
      %s586 = ssub.s32 16, 16
      %587 = vsyncadd [#allocation5], %s586
      %s589 = sshll.u32 [#allocation8], 4
      %s590 = int_to_ptr.vmem [resolvable:$true] %s589
      %592 = dma.vmem_to_hbm [thread:$0]  %s590, 16, %s5, [#allocation5]
    $region33: #{tpu_custom_call.1} parent=1 // pred_fallthru
      _
    // Predicated region
    $region34: #{tpu_custom_call.1} parent=1 // pred_check
      _
    $region35: #{tpu_custom_call.1} parent=1 // pred_check_branch
      %594 = sbr.rel (0) target = $region37
    $region36: #{tpu_custom_call.1} parent=1 // pred_region
      %595 = dma.done [#allocation5], 16
    $region37: #{tpu_custom_call.1} parent=1 // pred_fallthru
      _
    %596 = vsyncpa [#allocation4], 1
    %597 = vsyncpa [#allocation7], 1
    %598 = vsyncpa [#allocation5], 1

</llo_original>
